<compile_context>
chip_gen: v7x
topology: tpu7x:2x2x1
jax: 0.10.0
libtpu: 0.0.40
codegen_flags: <defaults>
</compile_context>

<pallas_src>
import functools

import jax
import jax.numpy as jnp
from jax.experimental import pallas as pl
from jax.experimental.pallas import tpu as pltpu

_LANES = 128
_SUBLANES = 8
_TR_MAX = 2048  # 2048 * 128 * 4 B = 1 MiB per f32 input block


def _dice_kernel(x_ref, lab_ref, out_ref, acc_ref):
    # x_ref:   (bb, tr, 128) float  logits tile for the current class
    # lab_ref: (bb, tr, 128) int    raw labels tile (padding marked with -1)
    # out_ref: (8, 128)      f32    per-class dice (broadcast over the tile)
    # acc_ref: (3, 8, 128)   f32    partials: [0]=inter, [1]=sum(sig), [2]=sum(t)
    c = pl.program_id(0)
    b = pl.program_id(1)
    r = pl.program_id(2)
    nb = pl.num_programs(1)
    nr = pl.num_programs(2)

    @pl.when((b == 0) & (r == 0))
    def _init():
        acc_ref[...] = jnp.zeros_like(acc_ref)

    x = x_ref[...].astype(jnp.float32)
    lab = lab_ref[...].astype(jnp.int32)

    # Sigmoid with both the exp and the divide on the EUP (approx reciprocal);
    # padded logits (-30) give sigmoid ~ 9e-14, so no padding mask is needed.
    sig = pl.reciprocal(1.0 + jnp.exp(-x), approx=True)
    t = (lab == c).astype(jnp.float32)  # padded labels are -1 -> never match

    def _vreg_sum(v):
        # (bb, tr, 128) -> (bb*tr/8, 8, 128); tr is a multiple of 8 so the
        # regrouping aligns with (8, 128) vreg tiles (free relayout), and the
        # axis-0 sum is pure cross-vreg VPU adds.
        return jnp.sum(v.reshape(-1, _SUBLANES, _LANES), axis=0)

    acc_ref[0] += _vreg_sum(sig * t)  # inter partials
    acc_ref[1] += _vreg_sum(sig)      # sum(sigmoid(x)) partials
    acc_ref[2] += _vreg_sum(t)        # sum(target) partials

    @pl.when((b == nb - 1) & (r == nr - 1))
    def _finalize():
        eps = jnp.float32(1e-4)
        inter = jnp.sum(acc_ref[0], keepdims=True)                       # (1, 1)
        union = (jnp.sum(acc_ref[1], keepdims=True)
                 + jnp.sum(acc_ref[2], keepdims=True) + eps)
        # Exact divide: runs once per class on a (1, 1) value.
        dice = 1.0 - (2.0 * inter + eps) / union
        out_ref[...] = jnp.broadcast_to(dice, out_ref.shape)


def multi_class_dice_loss(inputs, targets, n_classes, weights=None):
    """inputs: (B, C, H, W) float logits; targets: (B, H, W) int labels -> scalar f32."""
    B, C, H, W = inputs.shape
    assert C == n_classes
    HW = H * W

    # Row-tile the flattened spatial axis into (rows, 128) with rows a multiple
    # of 8 (sublane alignment for the in-kernel vreg reduce).
    rows = ((pl.cdiv(HW, _LANES) + _SUBLANES - 1) // _SUBLANES) * _SUBLANES
    if rows <= _TR_MAX:
        tr = rows
        # Fold whole batches into each block so small images still fill vregs.
        bb = max(1, min(B, _TR_MAX // rows))
        while B % bb:
            bb -= 1
    else:
        tr = _TR_MAX
        rows = pl.cdiv(rows, tr) * tr
        bb = 1
    nb = B // bb
    nr = rows // tr
    hw_pad = rows * _LANES

    lab_dtype = jnp.int8 if n_classes <= 127 else jnp.int32
    x = inputs.reshape(B, C, HW)                 # free reshape, no transpose / one-hot
    lab = targets.reshape(B, HW).astype(lab_dtype)

    if hw_pad != HW:
        pad = hw_pad - HW
        # Pad logits very negative (sigmoid ~ 0) and labels with -1 (outside
        # [0, n_classes)), so the kernel needs no padding mask.
        x = jnp.pad(x, ((0, 0), (0, 0), (0, pad)), constant_values=-30.0)
        lab = jnp.pad(lab, ((0, 0), (0, pad)), constant_values=-1)

    x = x.reshape(B, C, rows, _LANES)
    lab = lab.reshape(B, rows, _LANES)

    lab_bytes = jnp.dtype(lab_dtype).itemsize
    x_bytes = jnp.dtype(x.dtype).itemsize
    cost = pl.CostEstimate(
        flops=8 * B * C * hw_pad,
        transcendentals=2 * B * C * hw_pad,
        bytes_accessed=(x_bytes + lab_bytes) * B * C * hw_pad,
    )

    out = pl.pallas_call(
        _dice_kernel,
        out_shape=jax.ShapeDtypeStruct((C, _SUBLANES, _LANES), jnp.float32),
        grid_spec=pltpu.PrefetchScalarGridSpec(
            num_scalar_prefetch=0,
            grid=(C, nb, nr),                    # reduction axes (batch, rows) last
            in_specs=[
                pl.BlockSpec((bb, None, tr, _LANES), lambda c, b, r: (b, c, r, 0)),
                pl.BlockSpec((bb, tr, _LANES), lambda c, b, r: (b, r, 0)),
            ],
            out_specs=pl.BlockSpec((None, _SUBLANES, _LANES),
                                   lambda c, b, r: (c, 0, 0)),
            scratch_shapes=[pltpu.VMEM((3, _SUBLANES, _LANES), jnp.float32)],
        ),
        compiler_params=pltpu.CompilerParams(
            dimension_semantics=("parallel", "arbitrary", "arbitrary"),
        ),
        cost_estimate=cost,
    )(x, lab)

    dice_per_class = out[:, 0, 0]                # (C,)
    if weights is not None:
        dice_per_class = dice_per_class * jnp.asarray(weights, jnp.float32)
    # PyTorch module divides by n_classes regardless of weights; keep that.
    return jnp.sum(dice_per_class) / jnp.float32(n_classes)


def _reference(inputs, targets, n_classes):
    """Pure-JAX reference mirroring the PyTorch module (weights=None)."""
    eps = 1e-4
    onehot = jnp.transpose(
        jax.nn.one_hot(targets, n_classes, dtype=jnp.float32), (0, 3, 1, 2)
    )
    total = 0.0
    for i in range(n_classes):
        inp = jax.nn.sigmoid(inputs[:, i]).reshape(-1)
        tgt = onehot[:, i].reshape(-1)
        inter = jnp.dot(inp, tgt)
        union = jnp.sum(inp) + jnp.sum(tgt) + eps
        total = total + (1.0 - (2.0 * inter + eps) / union)
    return total / n_classes


if __name__ == "__main__":
    B, C, H, W = 2, 4, 16, 16
    key = jax.random.PRNGKey(0)
    k1, k2 = jax.random.split(key)
    inputs = jax.random.normal(k1, (B, C, H, W), dtype=jnp.float32)
    targets = jax.random.randint(k2, (B, H, W), 0, C, dtype=jnp.int32)

    loss = jax.block_until_ready(multi_class_dice_loss(inputs, targets, C))
    ref = jax.block_until_ready(_reference(inputs, targets, C))
    # Tolerance covers the approximate EUP reciprocal used inside the per-element
    # sigmoid (the per-class finalize divide is exact).
    assert jnp.allclose(loss, ref, atol=2e-3, rtol=2e-3), (loss, ref)
    print("KERNEL_OK")
</pallas_src>

<mosaic_0001>
module attributes {stable_mosaic.version = 11 : i64} {
  func.func @_dice_kernel(%arg0: i32, %arg1: i32, %arg2: i32, %arg3: memref<2x1x8x128xf32, #tpu.memory_space<vmem>>, %arg4: memref<2x8x128xi8, #tpu.memory_space<vmem>>, %arg5: memref<1x8x128xf32, #tpu.memory_space<vmem>>, %arg6: memref<3x8x128xf32, #tpu.memory_space<vmem>>) attributes {dimension_semantics = [#tpu.dimension_semantics<parallel>, #tpu.dimension_semantics<arbitrary>, #tpu.dimension_semantics<arbitrary>], iteration_bounds = array<i64: 4, 1, 1>, scalar_prefetch = 0 : i64, scratch_operands = 1 : i64, tpu.core_type = #tpu.core_type<tc>, window_params = [{transform_indices = @transform_0, window_bounds = array<i64: 2, 1, 8, 128>}, {transform_indices = @transform_1, window_bounds = array<i64: 2, 8, 128>}, {transform_indices = @transform_2, window_bounds = array<i64: 1, 8, 128>}]} {
    %c0_i32 = arith.constant 0 : i32
    %0 = arith.cmpi eq, %arg1, %c0_i32 : i32
    %c0_i32_0 = arith.constant 0 : i32
    %1 = arith.cmpi eq, %arg2, %c0_i32_0 : i32
    %2 = arith.andi %0, %1 : i1
    %3 = arith.extui %2 : i1 to i32
    %c0_i32_1 = arith.constant 0 : i32
    %4 = arith.cmpi ne, %3, %c0_i32_1 : i32
    scf.if %4 {
      %cst_31 = arith.constant 0.000000e+00 : f32
      %46 = vector.broadcast %cst_31 : f32 to vector<3x8x128xf32>
      %c0_32 = arith.constant 0 : index
      %c0_33 = arith.constant 0 : index
      %c0_34 = arith.constant 0 : index
      %47 = vector.load %arg6[%c0_32, %c0_33, %c0_34] : memref<3x8x128xf32, #tpu.memory_space<vmem>>, vector<3x8x128xf32>
      tpu.vector_store %arg6[%c0_32, %c0_33, %c0_34], %46 {strides = array<i32>} : memref<3x8x128xf32, #tpu.memory_space<vmem>>, vector<3x8x128xf32>,
    } else {
    }
    %c0 = arith.constant 0 : index
    %c0_2 = arith.constant 0 : index
    %c0_3 = arith.constant 0 : index
    %c0_4 = arith.constant 0 : index
    %5 = vector.load %arg3[%c0, %c0_2, %c0_3, %c0_4] : memref<2x1x8x128xf32, #tpu.memory_space<vmem>>, vector<2x1x8x128xf32>
    %6 = vector.shape_cast %5 : vector<2x1x8x128xf32> to vector<2x8x128xf32>
    %c0_5 = arith.constant 0 : index
    %c0_6 = arith.constant 0 : index
    %c0_7 = arith.constant 0 : index
    %7 = vector.load %arg4[%c0_5, %c0_6, %c0_7] : memref<2x8x128xi8, #tpu.memory_space<vmem>>, vector<2x8x128xi8>
    %8 = arith.extsi %7 : vector<2x8x128xi8> to vector<2x8x128xi32>
    %cst = arith.constant 0.000000e+00 : f32
    %9 = vector.broadcast %cst : f32 to vector<2x8x128xf32>
    %10 = arith.subf %9, %6 : vector<2x8x128xf32>
    %11 = math.exp %10 : vector<2x8x128xf32>
    %cst_8 = arith.constant 1.000000e+00 : f32
    %12 = vector.broadcast %cst_8 : f32 to vector<2x8x128xf32>
    %13 = arith.addf %12, %11 : vector<2x8x128xf32>
    %14 = tpu.reciprocal %13 {approx = true} : vector<2x8x128xf32> -> vector<2x8x128xf32>
    %15 = vector.broadcast %arg0 : i32 to vector<2x8x128xi32>
    %16 = arith.cmpi eq, %8, %15 : vector<2x8x128xi32>
    %17 = arith.extui %16 : vector<2x8x128xi1> to vector<2x8x128xi32>
    %18 = arith.sitofp %17 : vector<2x8x128xi32> to vector<2x8x128xf32>
    %c0_9 = arith.constant 0 : index
    %c0_10 = arith.constant 0 : index
    %c0_11 = arith.constant 0 : index
    %19 = vector.load %arg6[%c0_9, %c0_10, %c0_11] : memref<3x8x128xf32, #tpu.memory_space<vmem>>, vector<1x8x128xf32>
    %20 = vector.shape_cast %19 : vector<1x8x128xf32> to vector<8x128xf32>
    %21 = arith.mulf %14, %18 : vector<2x8x128xf32>
    %cst_12 = arith.constant dense<0.000000e+00> : vector<8x128xf32>
    %22 = vector.multi_reduction <add>, %21, %cst_12 [0] : vector<2x8x128xf32> to vector<8x128xf32>
    %23 = arith.addf %20, %22 : vector<8x128xf32>
    %c0_13 = arith.constant 0 : index
    %c0_14 = arith.constant 0 : index
    %c0_15 = arith.constant 0 : index
    %24 = vector.load %arg6[%c0_13, %c0_14, %c0_15] : memref<3x8x128xf32, #tpu.memory_space<vmem>>, vector<1x8x128xf32>
    %25 = vector.shape_cast %24 : vector<1x8x128xf32> to vector<8x128xf32>
    %26 = vector.shape_cast %23 : vector<8x128xf32> to vector<1x8x128xf32>
    tpu.vector_store %arg6[%c0_13, %c0_14, %c0_15], %26 {strides = array<i32>} : memref<3x8x128xf32, #tpu.memory_space<vmem>>, vector<1x8x128xf32>,
    %c1 = arith.constant 1 : index
    %c0_16 = arith.constant 0 : index
    %c0_17 = arith.constant 0 : index
    %27 = vector.load %arg6[%c1, %c0_16, %c0_17] : memref<3x8x128xf32, #tpu.memory_space<vmem>>, vector<1x8x128xf32>
    %28 = vector.shape_cast %27 : vector<1x8x128xf32> to vector<8x128xf32>
    %cst_18 = arith.constant dense<0.000000e+00> : vector<8x128xf32>
    %29 = vector.multi_reduction <add>, %14, %cst_18 [0] : vector<2x8x128xf32> to vector<8x128xf32>
    %30 = arith.addf %28, %29 : vector<8x128xf32>
    %c1_19 = arith.constant 1 : index
    %c0_20 = arith.constant 0 : index
    %c0_21 = arith.constant 0 : index
    %31 = vector.load %arg6[%c1_19, %c0_20, %c0_21] : memref<3x8x128xf32, #tpu.memory_space<vmem>>, vector<1x8x128xf32>
    %32 = vector.shape_cast %31 : vector<1x8x128xf32> to vector<8x128xf32>
    %33 = vector.shape_cast %30 : vector<8x128xf32> to vector<1x8x128xf32>
    tpu.vector_store %arg6[%c1_19, %c0_20, %c0_21], %33 {strides = array<i32>} : memref<3x8x128xf32, #tpu.memory_space<vmem>>, vector<1x8x128xf32>,
    %c2 = arith.constant 2 : index
    %c0_22 = arith.constant 0 : index
    %c0_23 = arith.constant 0 : index
    %34 = vector.load %arg6[%c2, %c0_22, %c0_23] : memref<3x8x128xf32, #tpu.memory_space<vmem>>, vector<1x8x128xf32>
    %35 = vector.shape_cast %34 : vector<1x8x128xf32> to vector<8x128xf32>
    %cst_24 = arith.constant dense<0.000000e+00> : vector<8x128xf32>
    %36 = vector.multi_reduction <add>, %18, %cst_24 [0] : vector<2x8x128xf32> to vector<8x128xf32>
    %37 = arith.addf %35, %36 : vector<8x128xf32>
    %c2_25 = arith.constant 2 : index
    %c0_26 = arith.constant 0 : index
    %c0_27 = arith.constant 0 : index
    %38 = vector.load %arg6[%c2_25, %c0_26, %c0_27] : memref<3x8x128xf32, #tpu.memory_space<vmem>>, vector<1x8x128xf32>
    %39 = vector.shape_cast %38 : vector<1x8x128xf32> to vector<8x128xf32>
    %40 = vector.shape_cast %37 : vector<8x128xf32> to vector<1x8x128xf32>
    tpu.vector_store %arg6[%c2_25, %c0_26, %c0_27], %40 {strides = array<i32>} : memref<3x8x128xf32, #tpu.memory_space<vmem>>, vector<1x8x128xf32>,
    %c0_i32_28 = arith.constant 0 : i32
    %41 = arith.cmpi eq, %arg1, %c0_i32_28 : i32
    %c0_i32_29 = arith.constant 0 : i32
    %42 = arith.cmpi eq, %arg2, %c0_i32_29 : i32
    %43 = arith.andi %41, %42 : i1
    %44 = arith.extui %43 : i1 to i32
    %c0_i32_30 = arith.constant 0 : i32
    %45 = arith.cmpi ne, %44, %c0_i32_30 : i32
    scf.if %45 {
      %c0_31 = arith.constant 0 : index
      %c0_32 = arith.constant 0 : index
      %c0_33 = arith.constant 0 : index
      %46 = vector.load %arg6[%c0_31, %c0_32, %c0_33] : memref<3x8x128xf32, #tpu.memory_space<vmem>>, vector<1x8x128xf32>
      %47 = vector.shape_cast %46 : vector<1x8x128xf32> to vector<8x128xf32>
      %48 = vector.shape_cast %47 : vector<8x128xf32> to vector<1x8x128xf32>
      %cst_34 = arith.constant dense<0.000000e+00> : vector<1xf32>
      %49 = vector.multi_reduction <add>, %48, %cst_34 [1, 2] : vector<1x8x128xf32> to vector<1xf32>
      %50 = vector.shape_cast %49 : vector<1xf32> to vector<1x1x1xf32>
      %51 = vector.extract %50[0, 0, 0] : f32 from vector<1x1x1xf32>
      %52 = vector.broadcast %51 : f32 to vector<1x1xf32>
      %c1_35 = arith.constant 1 : index
      %c0_36 = arith.constant 0 : index
      %c0_37 = arith.constant 0 : index
      %53 = vector.load %arg6[%c1_35, %c0_36, %c0_37] : memref<3x8x128xf32, #tpu.memory_space<vmem>>, vector<1x8x128xf32>
      %54 = vector.shape_cast %53 : vector<1x8x128xf32> to vector<8x128xf32>
      %55 = vector.shape_cast %54 : vector<8x128xf32> to vector<1x8x128xf32>
      %cst_38 = arith.constant dense<0.000000e+00> : vector<1xf32>
      %56 = vector.multi_reduction <add>, %55, %cst_38 [1, 2] : vector<1x8x128xf32> to vector<1xf32>
      %57 = vector.shape_cast %56 : vector<1xf32> to vector<1x1x1xf32>
      %58 = vector.extract %57[0, 0, 0] : f32 from vector<1x1x1xf32>
      %59 = vector.broadcast %58 : f32 to vector<1x1xf32>
      %c2_39 = arith.constant 2 : index
      %c0_40 = arith.constant 0 : index
      %c0_41 = arith.constant 0 : index
      %60 = vector.load %arg6[%c2_39, %c0_40, %c0_41] : memref<3x8x128xf32, #tpu.memory_space<vmem>>, vector<1x8x128xf32>
      %61 = vector.shape_cast %60 : vector<1x8x128xf32> to vector<8x128xf32>
      %62 = vector.shape_cast %61 : vector<8x128xf32> to vector<1x8x128xf32>
      %cst_42 = arith.constant dense<0.000000e+00> : vector<1xf32>
      %63 = vector.multi_reduction <add>, %62, %cst_42 [1, 2] : vector<1x8x128xf32> to vector<1xf32>
      %64 = vector.shape_cast %63 : vector<1xf32> to vector<1x1x1xf32>
      %65 = vector.extract %64[0, 0, 0] : f32 from vector<1x1x1xf32>
      %66 = vector.broadcast %65 : f32 to vector<1x1xf32>
      %67 = arith.addf %59, %66 : vector<1x1xf32>
      %cst_43 = arith.constant 9.99999974E-5 : f32
      %68 = vector.broadcast %cst_43 : f32 to vector<1x1xf32>
      %69 = arith.addf %67, %68 : vector<1x1xf32>
      %cst_44 = arith.constant 2.000000e+00 : f32
      %70 = vector.broadcast %cst_44 : f32 to vector<1x1xf32>
      %71 = arith.mulf %70, %52 : vector<1x1xf32>
      %cst_45 = arith.constant 9.99999974E-5 : f32
      %72 = vector.broadcast %cst_45 : f32 to vector<1x1xf32>
      %73 = arith.addf %71, %72 : vector<1x1xf32>
      %74 = arith.divf %73, %69 : vector<1x1xf32>
      %cst_46 = arith.constant 1.000000e+00 : f32
      %75 = vector.broadcast %cst_46 : f32 to vector<1x1xf32>
      %76 = arith.subf %75, %74 : vector<1x1xf32>
      %77 = vector.shape_cast %76 : vector<1x1xf32> to vector<1x1xf32>
      %78 = vector.broadcast %77 : vector<1x1xf32> to vector<8x128xf32>
      %c0_47 = arith.constant 0 : index
      %c0_48 = arith.constant 0 : index
      %c0_49 = arith.constant 0 : index
      %79 = vector.load %arg5[%c0_47, %c0_48, %c0_49] : memref<1x8x128xf32, #tpu.memory_space<vmem>>, vector<1x8x128xf32>
      %80 = vector.shape_cast %79 : vector<1x8x128xf32> to vector<8x128xf32>
      %81 = vector.shape_cast %78 : vector<8x128xf32> to vector<1x8x128xf32>
      tpu.vector_store %arg5[%c0_47, %c0_48, %c0_49], %81 {strides = array<i32>} : memref<1x8x128xf32, #tpu.memory_space<vmem>>, vector<1x8x128xf32>,
    } else {
    }
    return
  }
  func.func @transform_0(%arg0: i32, %arg1: i32, %arg2: i32) -> (i32, i32, i32, i32) {
    %c0_i32 = arith.constant 0 : i32
    %c0_i32_0 = arith.constant 0 : i32
    return %arg1, %arg0, %arg2, %c0_i32 : i32, i32, i32, i32
  }
  func.func @transform_1(%arg0: i32, %arg1: i32, %arg2: i32) -> (i32, i32, i32) {
    %c0_i32 = arith.constant 0 : i32
    %c0_i32_0 = arith.constant 0 : i32
    return %arg1, %arg2, %c0_i32 : i32, i32, i32
  }
  func.func @transform_2(%arg0: i32, %arg1: i32, %arg2: i32) -> (i32, i32, i32) {
    %c0_i32 = arith.constant 0 : i32
    %c0_i32_0 = arith.constant 0 : i32
    %c0_i32_1 = arith.constant 0 : i32
    return %arg0, %c0_i32, %c0_i32_0 : i32, i32, i32
  }
}

</mosaic_0001>

<llo_original>
// kernel: tpu_custom_call.1
$region0: #{tpu_custom_call.1}
  #allocation0 [shape = 'u32[]', space=smem, size = 0x4, offset = 0x4, fixed_abs, tag = 'smem constant byte address 0x4 - core index']
  #allocation1 [shape = 'u32[144,128]{1,0:T(1,128)}', space=vmem, size = 0x12000, scoped, tag = 'internal scratch']
  #allocation2 [shape = 'f32[3,8,128]{2,1,0:T(8,128)}', space=vmem, size = 0x3000, scoped, tag = 'scratch operand']
  %s0 = inlined_call_operand.hbm [shape: f32[2,4,8,128], index: 0, kind: input, shape index: {}]
  %s1 = inlined_call_operand.hbm [shape: s8[2,8,128], index: 1, kind: input, shape index: {}]
  %s2 = inlined_call_operand.hbm [shape: f32[4,8,128], index: 2, kind: output, shape index: {}]
  %s3 = sld [smem:[#allocation0]]
  $region57: #{tpu_custom_call.1} parent=0
    _
  %s5 = ssub.s32 1, %s3
  %s6 = scalar_select 0, %s5, %s3
  $region1: #{tpu_custom_call.1} parent=0
    #allocation3 [shape = 'u8[16384]{0}', space=vmem, size = 0x4000, scoped, tag = 'input window, operand 0']
    #allocation4 [shape = 's32[2]{0}', space=sflag, size = 0x8, scoped, tag = 'scoped memory for tpu_custom_call.1']
    #allocation5 [shape = 's32[2]{0}', space=sflag, size = 0x8, scoped, tag = 'scoped memory for tpu_custom_call.1']
    #allocation6 [shape = 'u8[2048]{0}', space=vmem, size = 0x800, scoped, tag = 'input window, operand 1, single buffered']
    #allocation7 [shape = 's32[1]{0}', space=sflag, size = 0x4, scoped, tag = 'scoped memory for tpu_custom_call.1']
    #allocation8 [shape = 'u8[8192]{0}', space=vmem, size = 0x2000, scoped, tag = 'output window, operand 0']
    %7 = vsyncpa [#allocation4], 0
    %s8 = scalar_lea.sflag [#allocation4], 1
    %9 = vsyncpa %s8, 0
    %10 = vsyncpa [#allocation7], 0
    %11 = vsyncpa [#allocation5], 0
    %s12 = scalar_lea.sflag [#allocation5], 1
    %13 = vsyncpa %s12, 0
    loop: start=0, step=1, limit=6
    $region2: #{tpu_custom_call.1} parent=1 // loop_pre_header
      _
    $region3: #{tpu_custom_call.1} parent=1 // loop_header
      %s15 = sphi 0, %s19
      %p16 = scmp.ge.s32.totalorder %s15, 6
      %s22 = sphi 0, %s41
      %s23 = sphi 0, %s37
      %s24 = sphi 0, %s33
      %s25 = sphi 0, %s22
      %s26 = sphi 0, %s23
      %s27 = sphi 0, %s24
      %s28 = sphi 0, %s25
      %s29 = sphi 0, %s26
      %s30 = sphi 0, %s27
      %s48 = sphi 0, %s50
      %s51 = sphi 0, %s48
      %s52 = sphi 0, %s51
      %s68 = sphi 0, %s52
      %s76 = sphi 0, %s78
      %s79 = sphi 0, %s76
      %s80 = sphi 0, %s79
      %s96 = sphi 0, %s80
      %s102 = sphi 0, %s104
      %s105 = sphi 0, %s102
      %s106 = sphi 0, %s105
      %s122 = sphi 0, %s106
    $region4: #{tpu_custom_call.1} parent=1 // loop_header_branch
      %18 = sbr.rel (%p16) target = $region8
    $region5: #{tpu_custom_call.1} parent=1 // loop_body
      %s20 = ssub.s32 %s15, 1
      %s21 = ssub.s32 %s15, 2
      %s31 = sadd.s32 1, %s24
      %p32 = scmp.ge.s32.totalorder %s31, 1
      %s33 = scalar_select %p32, 0, %s31
      %s34 = sadd.s32 1, %s23
      %s35 = scalar_select %p32, %s34, %s23
      %p36 = scmp.ge.s32.totalorder %s35, 1
      %s37 = scalar_select %p36, 0, %s35
      %s38 = sadd.s32 1, %s22
      %s39 = scalar_select %p36, %s38, %s22
      %p40 = scmp.ge.s32.totalorder %s39, 4
      %s41 = scalar_select %p40, 0, %s39
      %s42 = ssub.s32 %s23, %s37
      %s43 = ssub.s32 %s22, %s41
      %s44 = sor.u32 %s42, %s43
      %s45 = ssub.s32 %s24, %s33
      %s46 = sor.u32 %s44, %s45
      %p47 = scmp.eq.s32.totalorder %s46, 0
      %s49 = sadd.s32 %s48, 1
      %s50 = scalar_select %p47, %s48, %s49
      %p53 = pneg %p47
      %p54 = scmp.eq.s32.totalorder %s15, 3
      %p55 = por %p53, %p54
      %p56 = scmp.ne.s32.totalorder %s48, %s51
      %p57 = scmp.eq.s32.totalorder %s15, 0
      %p58 = por %p56, %p57
      %p59 = scmp.ne.s32.totalorder %s48, %s51
      %p60 = scmp.eq.s32.totalorder %s20, 3
      %p61 = por %p59, %p60
      %p62 = scmp.ne.s32.totalorder %s51, %s52
      %p63 = scmp.eq.s32.totalorder %s20, 0
      %p64 = por %p62, %p63
      %p65 = scmp.ne.s32.totalorder %s51, %s52
      %p66 = scmp.eq.s32.totalorder %s21, 3
      %p67 = por %p65, %p66
      %p69 = scmp.ne.s32.totalorder %s52, %s68
      %p70 = scmp.eq.s32.totalorder %s21, 0
      %p71 = por %p69, %p70
      %s72 = ssub.s32 %s23, %s37
      %s73 = ssub.s32 %s24, %s33
      %s74 = sor.u32 %s72, %s73
      %p75 = scmp.eq.s32.totalorder %s74, 0
      %s77 = sadd.s32 %s76, 1
      %s78 = scalar_select %p75, %s76, %s77
      %p81 = pneg %p75
      %p82 = scmp.eq.s32.totalorder %s15, 3
      %p83 = por %p81, %p82
      %p84 = scmp.ne.s32.totalorder %s76, %s79
      %p85 = scmp.eq.s32.totalorder %s15, 0
      %p86 = por %p84, %p85
      %p87 = scmp.ne.s32.totalorder %s76, %s79
      %p88 = scmp.eq.s32.totalorder %s20, 3
      %p89 = por %p87, %p88
      %p90 = scmp.ne.s32.totalorder %s79, %s80
      %p91 = scmp.eq.s32.totalorder %s20, 0
      %p92 = por %p90, %p91
      %p93 = scmp.ne.s32.totalorder %s79, %s80
      %p94 = scmp.eq.s32.totalorder %s21, 3
      %p95 = por %p93, %p94
      %p97 = scmp.ne.s32.totalorder %s80, %s96
      %p98 = scmp.eq.s32.totalorder %s21, 0
      %p99 = por %p97, %p98
      %s100 = ssub.s32 %s22, %s41
      %p101 = scmp.eq.s32.totalorder %s100, 0
      %s103 = sadd.s32 %s102, 1
      %s104 = scalar_select %p101, %s102, %s103
      %p107 = pneg %p101
      %p108 = scmp.eq.s32.totalorder %s15, 3
      %p109 = por %p107, %p108
      %p110 = scmp.ne.s32.totalorder %s102, %s105
      %p111 = scmp.eq.s32.totalorder %s15, 0
      %p112 = por %p110, %p111
      %p113 = scmp.ne.s32.totalorder %s102, %s105
      %p114 = scmp.eq.s32.totalorder %s20, 3
      %p115 = por %p113, %p114
      %p116 = scmp.ne.s32.totalorder %s105, %s106
      %p117 = scmp.eq.s32.totalorder %s20, 0
      %p118 = por %p116, %p117
      %p119 = scmp.ne.s32.totalorder %s105, %s106
      %p120 = scmp.eq.s32.totalorder %s21, 3
      %p121 = por %p119, %p120
      %p123 = scmp.ne.s32.totalorder %s106, %s122
      %p124 = scmp.eq.s32.totalorder %s21, 0
      %p125 = por %p123, %p124
      %p126 = scmp.le.s32.totalorder 1, %s15
      %p127 = scmp.lt.s32.totalorder %s15, 5
      %p128 = pnand %p126, %p127
      %p129 = pneg %p128
      // Predicated region
      $region9: #{tpu_custom_call.1} parent=5 // pred_check
        _
      $region10: #{tpu_custom_call.1} parent=5 // pred_check_branch
        %131 = sbr.rel (%p128) target = $region12
      $region11: #{tpu_custom_call.1} parent=5 // pred_region
        %s132 = ssub.s32 %s15, 1
        // Predicated region
        $region13: #{tpu_custom_call.1} parent=11 // pred_check
          %p133 = pneg %p92
        $region14: #{tpu_custom_call.1} parent=11 // pred_check_branch
          %135 = sbr.rel (%p133) target = $region16
        $region15: #{tpu_custom_call.1} parent=11 // pred_region
          %s136 = smul.u32 2, %s26
          %s138 = ssub.s32 64, 64
          %139 = vsyncadd [#allocation7], %s138
          %s140 = sadd.s32 %s27, %s136
          %s141 = smul.addr %s140, 32
          %s142 = scalar_lea.hbm %s1, %s141
          %s143 = sshll.u32 [#allocation6], 4
          %s144 = int_to_ptr.vmem [resolvable:$true] %s143
          %149 = dma.hbm_to_vmem [thread:$0]  %s142, 64, %s144, [#allocation7], 32, 32, 2
        $region16: #{tpu_custom_call.1} parent=11 // pred_fallthru
          _
      $region12: #{tpu_custom_call.1} parent=5 // pred_fallthru
        _
      %p150 = scmp.lt.s32.totalorder %s15, 4
      // Predicated region
      $region17: #{tpu_custom_call.1} parent=5 // pred_check
        %p151 = pneg %p150
      $region18: #{tpu_custom_call.1} parent=5 // pred_check_branch
        %153 = sbr.rel (%p151) target = $region20
      $region19: #{tpu_custom_call.1} parent=5 // pred_region
        // Predicated region
        $region21: #{tpu_custom_call.1} parent=19 // pred_check
          %p154 = pneg %p58
        $region22: #{tpu_custom_call.1} parent=19 // pred_check_branch
          %156 = sbr.rel (%p154) target = $region24
        $region23: #{tpu_custom_call.1} parent=19 // pred_region
          %s157 = sand.u32 %s48, 1
          %s158 = scalar_lea.sflag [#allocation4], %s157
          %s159 = sand.u32 %s48, 1
          %s160 = smul.addr %s159, 16
          %s161 = scalar_lea.vmem [#allocation3], %s160
          %s162 = smul.u32 2, %s23
          %s164 = ssub.s32 256, 256
          %165 = vsyncadd %s158, %s164
          %s166 = sadd.s32 %s24, %s22
          %s167 = smul.addr %s162, 4
          %s168 = sadd.s32 %s166, %s167
          %s169 = smul.addr %s168, 128
          %s170 = scalar_lea.hbm %s0, %s169
          %s171 = sshll.u32 %s161, 4
          %s172 = int_to_ptr.vmem [resolvable:$true] %s171
          %177 = dma.hbm_to_vmem [thread:$0]  %s170, 256, %s172, %s158, 512, 128, 8
        $region24: #{tpu_custom_call.1} parent=19 // pred_fallthru
          _
      $region20: #{tpu_custom_call.1} parent=5 // pred_fallthru
        _
      %p178 = scmp.le.s32.totalorder 1, %s15
      %p179 = scmp.lt.s32.totalorder %s15, 5
      %p180 = pnand %p178, %p179
      %p181 = pneg %p180
      // Predicated region
      $region25: #{tpu_custom_call.1} parent=5 // pred_check
        _
      $region26: #{tpu_custom_call.1} parent=5 // pred_check_branch
        %183 = sbr.rel (%p180) target = $region28
      $region27: #{tpu_custom_call.1} parent=5 // pred_region
        %s184 = ssub.s32 %s15, 1
        %s185 = sand.u32 %s51, 1
        %s186 = scalar_lea.sflag [#allocation4], %s185
        %s187 = sand.u32 %s51, 1
        %s188 = smul.addr %s187, 16
        %s189 = scalar_lea.vmem [#allocation3], %s188
        // Predicated region
        $region29: #{tpu_custom_call.1} parent=27 // pred_check
          %p190 = pneg %p64
        $region30: #{tpu_custom_call.1} parent=27 // pred_check_branch
          %192 = sbr.rel (%p190) target = $region32
        $region31: #{tpu_custom_call.1} parent=27 // pred_region
          %193 = dma.done %s186, 256
        $region32: #{tpu_custom_call.1} parent=27 // pred_fallthru
          _
        // Predicated region
        $region33: #{tpu_custom_call.1} parent=27 // pred_check
          %p194 = pneg %p92
        $region34: #{tpu_custom_call.1} parent=27 // pred_check_branch
          %196 = sbr.rel (%p194) target = $region36
        $region35: #{tpu_custom_call.1} parent=27 // pred_region
          %197 = dma.done [#allocation7], 64
        $region36: #{tpu_custom_call.1} parent=27 // pred_fallthru
          _
        %s198 = sand.u32 %s51, 1
        %s199 = scalar_lea.sflag [#allocation4], %s198
        %s200 = sand.u32 %s51, 1
        %s201 = smul.addr %s200, 16
        %s202 = scalar_lea.vmem [#allocation3], %s201
        %p203 = pneg %p64
        %p204 = pneg %p61
        %p205 = pneg %p92
        %p206 = pneg %p89
        %p207 = pneg %p118
        %p208 = pneg %p115
        %s209 = sand.u32 %s105, 1
        %s210 = scalar_lea.sflag [#allocation5], %s209
        %s211 = sand.u32 %s105, 1
        %s212 = smul.addr %s211, 8
        %s213 = scalar_lea.vmem [#allocation8], %s212
        %s214 = smul.u32 2, %s26
        %s215 = smul.u32 2, %s26
        %p216 = scmp.eq.s32.totalorder %s26, 0
        %p217 = scmp.eq.s32.totalorder %s27, 0
        %p218 = pnand %p216, %p217
        %p219 = pneg %p218
        // Predicated region
        $region37: #{tpu_custom_call.1} parent=27 // pred_check
          _
        $region38: #{tpu_custom_call.1} parent=27 // pred_check_branch
          %221 = sbr.rel (%p218) target = $region40
        $region39: #{tpu_custom_call.1} parent=27 // pred_region
          %222 = vst [vmem:[#allocation2] sm:$0xff] 0.0
          %223 = vst [vmem:[#allocation2 + $0x8] sm:$0xff] 0.0
          %224 = vst [vmem:[#allocation2 + $0x10] sm:$0xff] 0.0
        $region40: #{tpu_custom_call.1} parent=27 // pred_fallthru
          _
        %v225 = vld [vmem:[%s189] sm:$0xff]
        %v226 = vld [vmem:[%s189 + $0x8] sm:$0xff]
        %v227 = vld [vmem:[#allocation6] sm:$0x3]
        %v228 = vld [vmem:[#allocation6 + $0x2] sm:$0x3]
        %v229 = vunpack.c.0.s8 %v227
        %v230 = vunpack.c.0.s8 %v228
        %v231 = vsub.f32 0.0, %v225
        %v232 = vsub.f32 0.0, %v226
        %v233 = vmul.f32 %v231, 1.442695
        %v234 = vpow.pop %v233
        %v235 = vmul.f32 %v232, 1.442695
        %v236 = vpow.pop %v235
        %v237 = vadd.f32 %v234, 1.0
        %v238 = vadd.f32 %v236, 1.0
        %v239 = vrcp.pop %v237
        %v240 = vrcp.pop %v238
        %v241 = vstv %s25
        %vm242 = vcmp.eq.s32.totalorder %v229, %v241
        %vm243 = vcmp.eq.s32.totalorder %v230, %v241
        %v244 = vsel %vm242, 1, 0
        %v245 = vsel %vm243, 1, 0
        %v246 = vcvt.s32.f32 %v244
        %v247 = vcvt.s32.f32 %v245
        %v248 = vld [vmem:[#allocation2] sm:$0xff]
        %v249 = vmul.f32 %v239, %v246
        %v250 = vmul.f32 %v240, %v247
        %v251 = vadd.f32 %v249, %v250
        %v252 = vadd.f32 %v248, %v251
        %253 = vst [vmem:[#allocation2] sm:$0xff] %v252
        %s254 = scalar_lea.vmem [#allocation2], 8
        %v255 = vld [vmem:[%s254] sm:$0xff]
        %v256 = vadd.f32 %v239, %v240
        %v257 = vadd.f32 %v255, %v256
        %258 = vst [vmem:[%s254] sm:$0xff] %v257
        %s259 = scalar_lea.vmem [#allocation2], 16
        %v260 = vld [vmem:[%s259] sm:$0xff]
        %v261 = vadd.f32 %v246, %v247
        %v262 = vadd.f32 %v260, %v261
        %263 = vst [vmem:[%s259] sm:$0xff] %v262
        // Predicated region
        $region41: #{tpu_custom_call.1} parent=27 // pred_check
          _
        $region42: #{tpu_custom_call.1} parent=27 // pred_check_branch
          %265 = sbr.rel (%p218) target = $region44
        $region43: #{tpu_custom_call.1} parent=27 // pred_region
          %v266 = vld [vmem:[#allocation2] sm:$0xff]
          %267 = vadd.xlane.f32.xlu0 %v266
          %v268 = vpop.xlane.xlu0 %267
          %v269 = vrot.slane %v268, 4
          %v270 = vadd.f32 %v268, %v269
          %v271 = vrot.slane %v270, 2
          %v272 = vadd.f32 %v270, %v271
          %v273 = vrot.slane %v272, 1
          %v274 = vadd.f32 %v272, %v273
          %s275 = vtos %v274
          %v276 = vstv %s275
          %v277 = vld [vmem:[%s254] sm:$0xff]
          %278 = vadd.xlane.f32.xlu0 %v277
          %v279 = vpop.xlane.xlu0 %278
          %v280 = vrot.slane %v279, 4
          %v281 = vadd.f32 %v279, %v280
          %v282 = vrot.slane %v281, 2
          %v283 = vadd.f32 %v281, %v282
          %v284 = vrot.slane %v283, 1
          %v285 = vadd.f32 %v283, %v284
          %s286 = vtos %v285
          %v287 = vstv %s286
          %v288 = vld [vmem:[%s259] sm:$0xff]
          %289 = vadd.xlane.f32.xlu0 %v288
          %v290 = vpop.xlane.xlu0 %289
          %v291 = vrot.slane %v290, 4
          %v292 = vadd.f32 %v290, %v291
          %v293 = vrot.slane %v292, 2
          %v294 = vadd.f32 %v292, %v293
          %v295 = vrot.slane %v294, 1
          %v296 = vadd.f32 %v294, %v295
          %s297 = vtos %v296
          %v298 = vstv %s297
          %v299 = vadd.f32 %v287, %v298
          %v300 = vadd.f32 %v299, 0.0001
          %v301 = vmul.f32 %v276, 2.0
          %v302 = vadd.f32 %v301, 0.0001
          %v303 = vrcp.pop %v300
          %v304 = vmul.f32 %v302, %v303
          %v305 = vsub.f32 1.0, %v304
          %306 = vst [vmem:[%s213] sm:$0xff] %v305
        $region44: #{tpu_custom_call.1} parent=27 // pred_fallthru
          _
        %s307 = sand.u32 %s105, 1
        %s308 = scalar_lea.sflag [#allocation5], %s307
        %s309 = sand.u32 %s105, 1
        %s310 = smul.addr %s309, 8
        %s311 = scalar_lea.vmem [#allocation8], %s310
        // Predicated region
        $region45: #{tpu_custom_call.1} parent=27 // pred_check
          %p312 = pneg %p115
        $region46: #{tpu_custom_call.1} parent=27 // pred_check_branch
          %314 = sbr.rel (%p312) target = $region48
        $region47: #{tpu_custom_call.1} parent=27 // pred_region
          %s316 = ssub.s32 128, 128
          %317 = vsyncadd %s308, %s316
          %s318 = smul.addr %s25, 128
          %s319 = scalar_lea.hbm %s2, %s318
          %s321 = sshll.u32 %s311, 4
          %s322 = int_to_ptr.vmem [resolvable:$true] %s321
          %324 = dma.vmem_to_hbm [thread:$0]  %s322, 128, %s319, %s308
        $region48: #{tpu_custom_call.1} parent=27 // pred_fallthru
          _
      $region28: #{tpu_custom_call.1} parent=5 // pred_fallthru
        _
      %p325 = scmp.le.s32.totalorder 2, %s15
      // Predicated region
      $region49: #{tpu_custom_call.1} parent=5 // pred_check
        %p326 = pneg %p325
      $region50: #{tpu_custom_call.1} parent=5 // pred_check_branch
        %328 = sbr.rel (%p326) target = $region52
      $region51: #{tpu_custom_call.1} parent=5 // pred_region
        %s329 = ssub.s32 %s15, 2
        // Predicated region
        $region53: #{tpu_custom_call.1} parent=51 // pred_check
          %p330 = pneg %p121
        $region54: #{tpu_custom_call.1} parent=51 // pred_check_branch
          %332 = sbr.rel (%p330) target = $region56
        $region55: #{tpu_custom_call.1} parent=51 // pred_region
          %s333 = sand.u32 %s106, 1
          %s334 = scalar_lea.sflag [#allocation5], %s333
          %s335 = sand.u32 %s106, 1
          %s336 = smul.addr %s335, 8
          %s337 = scalar_lea.vmem [#allocation8], %s336
          %338 = dma.done %s334, 128
        $region56: #{tpu_custom_call.1} parent=51 // pred_fallthru
          _
      $region52: #{tpu_custom_call.1} parent=5 // pred_fallthru
        _
    $region6: #{tpu_custom_call.1} parent=1 // loop_footer
      %s19 = sadd.s32 1, %s15
    $region7: #{tpu_custom_call.1} parent=1 // loop_footer_branch
      %14 = sbr.rel target = $region3
    $region8: #{tpu_custom_call.1} parent=1 // loop_exit
      _
    %339 = vsyncpa [#allocation4], 1
    %s340 = scalar_lea.sflag [#allocation4], 1
    %341 = vsyncpa %s340, 1
    %342 = vsyncpa [#allocation7], 1
    %343 = vsyncpa [#allocation5], 1
    %s344 = scalar_lea.sflag [#allocation5], 1
    %345 = vsyncpa %s344, 1

</llo_original>
